<compile_context>
chip_gen: v7x
topology: tpu7x:2x2x1
jax: 0.10.0
libtpu: 0.0.40
codegen_flags: <defaults>
</compile_context>

<pallas_src>
import functools
import math

import jax
import jax.numpy as jnp
import numpy as np
from jax import lax
from jax.experimental import pallas as pl
from jax.experimental.pallas import tpu as pltpu


_VMEM_LIMIT = 32 * 1024 * 1024   # fits the scoped budgets of v5e/v6e/v7x


def _pick_tile(dim, target, granularity):
    """Largest divisor of `dim` that is <= target and a multiple of
    `granularity`; falls back to the full dim (always a legal block size)."""
    if dim <= target:
        return dim
    t = (target // granularity) * granularity
    while t >= granularity:
        if dim % t == 0:
            return t
        t -= granularity
    return dim


# ----------------------------------------------------------------------------
# Tiled linear kernel: y = x @ W_t + b   (W_t pre-transposed: [Din, Dout])
# ----------------------------------------------------------------------------
def _linear_kernel(x_ref, wt_ref, b_ref, o_ref, acc_ref):
    @pl.when(pl.program_id(2) == 0)
    def _():
        acc_ref[...] = jnp.zeros_like(acc_ref)

    acc_ref[...] += jnp.dot(x_ref[...], wt_ref[...],
                            preferred_element_type=jnp.float32)

    @pl.when(pl.program_id(2) == pl.num_programs(2) - 1)
    def _():
        o_ref[...] = (acc_ref[...] + b_ref[...]).astype(o_ref.dtype)


def linear(x2d, w_t, b, *, tm_target=256, tn_target=256, tk_target=512):
    """x2d: [N, Din], w_t: [Din, Dout] (pre-transposed), b: [Dout] -> [N, Dout]."""
    n, din = x2d.shape
    dout = w_t.shape[1]
    tm = _pick_tile(n, tm_target, 8)
    tn = _pick_tile(dout, tn_target, 128)
    tk = _pick_tile(din, tk_target, 128)
    grid = (n // tm, dout // tn, din // tk)
    return pl.pallas_call(
        _linear_kernel,
        grid=grid,
        in_specs=[
            pl.BlockSpec((tm, tk), lambda i, j, k: (i, k)),
            pl.BlockSpec((tk, tn), lambda i, j, k: (k, j)),
            pl.BlockSpec((1, tn), lambda i, j, k: (0, j)),
        ],
        out_specs=pl.BlockSpec((tm, tn), lambda i, j, k: (i, j)),
        out_shape=jax.ShapeDtypeStruct((n, dout), x2d.dtype),
        scratch_shapes=[pltpu.VMEM((tm, tn), jnp.float32)],
        compiler_params=pltpu.CompilerParams(
            dimension_semantics=("parallel", "parallel", "arbitrary"),
            vmem_limit_bytes=_VMEM_LIMIT),
    )(x2d, w_t, b.reshape(1, dout))


# ----------------------------------------------------------------------------
# Attention kernel: one (batch, query-tile) per grid step, all heads at once.
# ----------------------------------------------------------------------------
def _attention_kernel(scale, num_head, use_mask, emit_attn, mxu_dtype, *refs):
    q_ref, k_ref, v_ref = refs[0], refs[1], refs[2]
    idx = 3
    mask_ref = None
    if use_mask:
        mask_ref = refs[idx]
        idx += 1
    o_ref = refs[idx]
    idx += 1
    attn_ref = refs[idx] if emit_attn else None

    tq, d_model = q_ref.shape[1], q_ref.shape[2]
    dk = d_model // num_head

    # Fold the softmax scale into q: tq*D multiplies instead of H*tq*S.
    q = q_ref[0].astype(jnp.float32) * jnp.float32(scale)      # [tq, D]
    k = k_ref[0].astype(jnp.float32)                            # [S,  D]
    v = v_ref[0].astype(jnp.float32)                            # [S,  D]
    if use_mask:
        neg = mask_ref[0].astype(jnp.int32) == 0                # [tq, S] bool

    head_outs = []
    for h in range(num_head):                                   # unrolled, all in ONE grid step
        lo = h * dk
        qh = q[:, lo:lo + dk]                                    # [tq, dk]
        kh = k[:, lo:lo + dk]                                    # [S,  dk]
        vh = v[:, lo:lo + dk]                                    # [S,  dk]
        if mxu_dtype is not None:                                # optional bf16 MXU path (v6e/v7x)
            qh, kh, vh = (x.astype(mxu_dtype) for x in (qh, kh, vh))
        # scores = qh @ kh^T  (contraction over dk), f32 accumulation on MXU
        s = lax.dot_general(qh, kh, (((1,), (1,)), ((), ())),
                            preferred_element_type=jnp.float32)  # [tq, S]
        if use_mask:
            s = jnp.where(neg, jnp.float32(-1000000000.0), s)
        s_max = jnp.max(s, axis=-1, keepdims=True)
        e = jnp.exp(s - s_max)
        denom = jnp.sum(e, axis=-1, keepdims=True)
        p = e * pl.reciprocal(denom, approx=True)                # EUP slot, VALU freed
        if emit_attn:
            attn_ref[0, h] = p
        pm = p.astype(mxu_dtype) if mxu_dtype is not None else p
        head_outs.append(jnp.dot(pm, vh,
                                 preferred_element_type=jnp.float32))  # [tq, dk]

    # Single lane-dense store of the packed heads (last dim = H*dk = D).
    o_ref[0] = jnp.concatenate(head_outs, axis=-1).astype(o_ref.dtype)


def attention_core(q, k, v, mask_bss, scale, num_head, emit_attn, mxu_dtype=None):
    """q/k/v: [B, S, D]; mask_bss: [B, S, S] int8 or None."""
    B, S, D = q.shape
    tq = _pick_tile(S, 256, 8)
    use_mask = mask_bss is not None
    kernel = functools.partial(_attention_kernel, scale, num_head,
                               use_mask, emit_attn, mxu_dtype)

    in_specs = [
        pl.BlockSpec((1, tq, D), lambda b, qi: (b, qi, 0)),
        pl.BlockSpec((1, S, D), lambda b, qi: (b, 0, 0)),
        pl.BlockSpec((1, S, D), lambda b, qi: (b, 0, 0)),
    ]
    inputs = [q, k, v]
    if use_mask:
        in_specs.append(pl.BlockSpec((1, tq, S), lambda b, qi: (b, qi, 0)))
        inputs.append(mask_bss)

    out_specs = [pl.BlockSpec((1, tq, D), lambda b, qi: (b, qi, 0))]
    out_shape = [jax.ShapeDtypeStruct((B, S, D), q.dtype)]
    if emit_attn:
        out_specs.append(
            pl.BlockSpec((1, num_head, tq, S), lambda b, qi: (b, 0, qi, 0)))
        out_shape.append(jax.ShapeDtypeStruct((B, num_head, S, S), jnp.float32))

    # TODO(synk): for very long sequences add key-axis flash tiling (online
    # softmax) so the K/V blocks are not O(S*D) per step.
    outs = pl.pallas_call(
        kernel,
        grid=(B, S // tq),
        in_specs=in_specs,
        out_specs=out_specs,
        out_shape=out_shape,
        compiler_params=pltpu.CompilerParams(
            dimension_semantics=("parallel", "parallel"),
            vmem_limit_bytes=_VMEM_LIMIT),
    )(*inputs)
    return (outs[0], outs[1]) if emit_attn else (outs[0], None)


# ----------------------------------------------------------------------------
# Module wrapper (parameters initialized deterministically in-script).
# ----------------------------------------------------------------------------
class MultiHeadAttentionPallas:
    def __init__(self, num_head, dim_input, dropout_prob=0.1, bias=True,
                 key=None, mxu_dtype=None):
        # mxu_dtype: set to jnp.bfloat16 on v6e/v7x to run the MXU matmuls in
        # bf16 with f32 accumulation; keep None on v5e / for f32-exact parity.
        self.num_head = num_head
        self.dim_input = dim_input
        self.dim_key = dim_input // num_head
        self.scale = 1.0 / math.sqrt(self.dim_key)
        self.mxu_dtype = mxu_dtype
        self.attn = None

        key = jax.random.PRNGKey(0) if key is None else key
        ks = jax.random.split(key, 8)
        lim = 1.0 / math.sqrt(dim_input)

        def u(k, shape):
            return jax.random.uniform(k, shape, jnp.float32, -lim, lim)

        hd = num_head * self.dim_key
        # Weights are stored PRE-TRANSPOSED as [Din, Dout] so the linear kernel
        # never pays a per-call w.T transpose (full HBM pass) per projection.
        self.wq_t, self.bq = u(ks[0], (dim_input, hd)), u(ks[1], (hd,))
        # NOTE: the reference forward applies `self.query` to both query and
        # key, so these "key" weights are dead parameters (kept for parity).
        self.wk_t, self.bk = u(ks[2], (dim_input, hd)), u(ks[3], (hd,))
        self.wv_t, self.bv = u(ks[4], (dim_input, hd)), u(ks[5], (hd,))
        self.wo_t, self.bo = u(ks[6], (dim_input, dim_input)), u(ks[7], (dim_input,))

    def __call__(self, query, key, value, mask=None, store_attn=False):
        S, B, D = query.shape
        H = self.num_head

        # One cheap [S,B,D] -> [B,S,D] swap per tensor so every kernel block is
        # lane-dense (last dim = D) with batch as the leading parallel axis;
        # all later "reshape"s ([B*S,D] <-> [B,S,D]) are free metadata changes.
        q_bsd = jnp.transpose(query, (1, 0, 2))
        k_bsd = jnp.transpose(key, (1, 0, 2))
        v_bsd = jnp.transpose(value, (1, 0, 2))

        # Reproduce reference semantics exactly: the key projection uses the
        # *query* HeadSplit weights (as written in the PyTorch forward).
        q = linear(q_bsd.reshape(B * S, D), self.wq_t, self.bq).reshape(B, S, D)
        k = linear(k_bsd.reshape(B * S, D), self.wq_t, self.bq).reshape(B, S, D)
        v = linear(v_bsd.reshape(B * S, D), self.wv_t, self.bv).reshape(B, S, D)

        if mask is None:
            mask_bss = None
        else:
            assert mask.shape[0] == 1 or mask.shape[0] == mask.shape[1]
            m = mask
            if m.shape[0] == 1:
                m = jnp.broadcast_to(m, (S,) + m.shape[1:])
            # int8 mask: 4x less HBM/VMEM than f32; layout [B, S_i, S_j].
            mask_bss = jnp.transpose(m, (2, 0, 1)).astype(jnp.int8)

        out_bsd, attn_bhss = attention_core(
            q, k, v, mask_bss, self.scale, H, store_attn, self.mxu_dtype)

        if store_attn:
            # torch layout [i, j, b, h] only when weights are requested.
            self.attn = jnp.transpose(attn_bhss, (2, 3, 0, 1))
        else:
            self.attn = None
        # TODO(synk): dropout on attn omitted (eval-mode identity); training
        # parity would need pltpu PRNG-based dropout inside the kernel.

        out = linear(out_bsd.reshape(B * S, D), self.wo_t, self.bo).reshape(B, S, D)
        return jnp.transpose(out, (1, 0, 2))     # back to torch [S, B, D]


# ----------------------------------------------------------------------------
# Pure-JAX reference (mirrors the PyTorch forward) for a correctness check.
# ----------------------------------------------------------------------------
def reference_forward(mha, query, key, value, mask=None):
    S, B, _ = query.shape
    H, dk = mha.num_head, mha.dim_key

    def head_split(x, w_t, b):
        return (x @ w_t + b).reshape(S, B, H, dk)

    q = head_split(query, mha.wq_t, mha.bq)
    k = head_split(key, mha.wq_t, mha.bq)    # same reference bug: query weights
    v = head_split(value, mha.wv_t, mha.bv)
    scores = jnp.einsum('ibhd,jbhd->ijbh', q, k) * mha.scale
    if mask is not None:
        scores = jnp.where(mask[..., None] == 0, -1000000000.0, scores)
    attn = jax.nn.softmax(scores, axis=1)
    x = jnp.einsum('ijbh,jbhd->ibhd', attn, v).reshape(S, B, -1)
    return x @ mha.wo_t + mha.bo, attn


if __name__ == "__main__":
    S, B, D, H = 8, 2, 32, 4
    key0 = jax.random.PRNGKey(0)
    kq, kk, kv, kp = jax.random.split(key0, 4)
    q = jax.random.normal(kq, (S, B, D), jnp.float32)
    k = jax.random.normal(kk, (S, B, D), jnp.float32)
    v = jax.random.normal(kv, (S, B, D), jnp.float32)
    # causal mask: mask[i, j, b] == 1 iff query i may attend to key j
    mask = jnp.broadcast_to(
        jnp.tril(jnp.ones((S, S), jnp.float32))[:, :, None], (S, S, B))

    mha = MultiHeadAttentionPallas(H, D, key=kp)

    # Path 1: masked, attention weights materialized (torch-parity path).
    out = mha(q, k, v, mask, store_attn=True)
    jax.block_until_ready(out)
    ref_out, ref_attn = reference_forward(mha, q, k, v, mask)
    assert out.shape == (S, B, D)
    np.testing.assert_allclose(np.asarray(out), np.asarray(ref_out),
                               rtol=2e-3, atol=2e-3)
    np.testing.assert_allclose(np.asarray(mha.attn), np.asarray(ref_attn),
                               rtol=2e-3, atol=2e-3)

    # Path 2: lean path — no mask, no SxS attention writeback.
    out2 = mha(q, k, v, None, store_attn=False)
    jax.block_until_ready(out2)
    ref_out2, _ = reference_forward(mha, q, k, v, None)
    np.testing.assert_allclose(np.asarray(out2), np.asarray(ref_out2),
                               rtol=2e-3, atol=2e-3)

    print("KERNEL_OK")
</pallas_src>

<mosaic_0001>
module attributes {stable_mosaic.version = 11 : i64} {
  func.func @_linear_kernel(%arg0: i32, %arg1: i32, %arg2: i32, %arg3: memref<16x32xf32, #tpu.memory_space<vmem>>, %arg4: memref<32x32xf32, #tpu.memory_space<vmem>>, %arg5: memref<1x32xf32, #tpu.memory_space<vmem>>, %arg6: memref<16x32xf32, #tpu.memory_space<vmem>>, %arg7: memref<16x32xf32, #tpu.memory_space<vmem>>) attributes {dimension_semantics = [#tpu.dimension_semantics<parallel>, #tpu.dimension_semantics<parallel>, #tpu.dimension_semantics<arbitrary>], iteration_bounds = array<i64: 1, 1, 1>, scalar_prefetch = 0 : i64, scratch_operands = 1 : i64, tpu.core_type = #tpu.core_type<tc>, window_params = [{transform_indices = @transform_0, window_bounds = array<i64: 16, 32>}, {transform_indices = @transform_1, window_bounds = array<i64: 32, 32>}, {transform_indices = @transform_2, window_bounds = array<i64: 1, 32>}, {transform_indices = @transform_3, window_bounds = array<i64: 16, 32>}]} {
    %c0_i32 = arith.constant 0 : i32
    %0 = arith.cmpi eq, %arg2, %c0_i32 : i32
    %1 = arith.extui %0 : i1 to i32
    %c0_i32_0 = arith.constant 0 : i32
    %2 = arith.cmpi ne, %1, %c0_i32_0 : i32
    scf.if %2 {
      %cst_10 = arith.constant 0.000000e+00 : f32
      %12 = vector.broadcast %cst_10 : f32 to vector<16x32xf32>
      %c0_11 = arith.constant 0 : index
      %c0_12 = arith.constant 0 : index
      %13 = vector.load %arg7[%c0_11, %c0_12] : memref<16x32xf32, #tpu.memory_space<vmem>>, vector<16x32xf32>
      tpu.vector_store %arg7[%c0_11, %c0_12], %12 {strides = array<i32>} : memref<16x32xf32, #tpu.memory_space<vmem>>, vector<16x32xf32>,
    } else {
    }
    %c0 = arith.constant 0 : index
    %c0_1 = arith.constant 0 : index
    %3 = vector.load %arg7[%c0, %c0_1] : memref<16x32xf32, #tpu.memory_space<vmem>>, vector<16x32xf32>
    %c0_2 = arith.constant 0 : index
    %c0_3 = arith.constant 0 : index
    %4 = vector.load %arg3[%c0_2, %c0_3] : memref<16x32xf32, #tpu.memory_space<vmem>>, vector<16x32xf32>
    %c0_4 = arith.constant 0 : index
    %c0_5 = arith.constant 0 : index
    %5 = vector.load %arg4[%c0_4, %c0_5] : memref<32x32xf32, #tpu.memory_space<vmem>>, vector<32x32xf32>
    %cst = arith.constant dense<0.000000e+00> : vector<16x32xf32>
    %6 = tpu.matmul %4, %5, %cst {dimension_numbers = #tpu.dot_dimension_numbers<[1], [0], [0], [1], [0, 0, 1, 1], [], []>} : vector<16x32xf32>, vector<32x32xf32>, vector<16x32xf32> -> vector<16x32xf32>
    %7 = arith.addf %3, %6 : vector<16x32xf32>
    %c0_6 = arith.constant 0 : index
    %c0_7 = arith.constant 0 : index
    %8 = vector.load %arg7[%c0_6, %c0_7] : memref<16x32xf32, #tpu.memory_space<vmem>>, vector<16x32xf32>
    tpu.vector_store %arg7[%c0_6, %c0_7], %7 {strides = array<i32>} : memref<16x32xf32, #tpu.memory_space<vmem>>, vector<16x32xf32>,
    %c0_i32_8 = arith.constant 0 : i32
    %9 = arith.cmpi eq, %arg2, %c0_i32_8 : i32
    %10 = arith.extui %9 : i1 to i32
    %c0_i32_9 = arith.constant 0 : i32
    %11 = arith.cmpi ne, %10, %c0_i32_9 : i32
    scf.if %11 {
      %c0_10 = arith.constant 0 : index
      %c0_11 = arith.constant 0 : index
      %12 = vector.load %arg7[%c0_10, %c0_11] : memref<16x32xf32, #tpu.memory_space<vmem>>, vector<16x32xf32>
      %c0_12 = arith.constant 0 : index
      %c0_13 = arith.constant 0 : index
      %13 = vector.load %arg5[%c0_12, %c0_13] : memref<1x32xf32, #tpu.memory_space<vmem>>, vector<1x32xf32>
      %14 = vector.broadcast %13 : vector<1x32xf32> to vector<16x32xf32>
      %15 = arith.addf %12, %14 : vector<16x32xf32>
      %c0_14 = arith.constant 0 : index
      %c0_15 = arith.constant 0 : index
      %16 = vector.load %arg6[%c0_14, %c0_15] : memref<16x32xf32, #tpu.memory_space<vmem>>, vector<16x32xf32>
      tpu.vector_store %arg6[%c0_14, %c0_15], %15 {strides = array<i32>} : memref<16x32xf32, #tpu.memory_space<vmem>>, vector<16x32xf32>,
    } else {
    }
    return
  }
  func.func @transform_0(%arg0: i32, %arg1: i32, %arg2: i32) -> (i32, i32) {
    %c0_i32 = arith.constant 0 : i32
    return %arg0, %arg2 : i32, i32
  }
  func.func @transform_1(%arg0: i32, %arg1: i32, %arg2: i32) -> (i32, i32) {
    %c0_i32 = arith.constant 0 : i32
    return %arg2, %arg1 : i32, i32
  }
  func.func @transform_2(%arg0: i32, %arg1: i32, %arg2: i32) -> (i32, i32) {
    %c0_i32 = arith.constant 0 : i32
    %c0_i32_0 = arith.constant 0 : i32
    return %c0_i32, %arg1 : i32, i32
  }
  func.func @transform_3(%arg0: i32, %arg1: i32, %arg2: i32) -> (i32, i32) {
    %c0_i32 = arith.constant 0 : i32
    return %arg0, %arg1 : i32, i32
  }
}

</mosaic_0001>

<llo_original>
// kernel: tpu_custom_call.1
$region0: #{tpu_custom_call.1}
  #allocation0 [shape = 'u32[]', space=smem, size = 0x4, offset = 0x4, fixed_abs, tag = 'smem constant byte address 0x4 - core index']
  #allocation1 [shape = 'u32[144,128]{1,0:T(1,128)}', space=vmem, size = 0x12000, scoped, tag = 'internal scratch']
  #allocation2 [shape = 'f32[16,32]{1,0:T(8,128)}', space=vmem, size = 0x2000, scoped, tag = 'scratch operand']
  %s0 = inlined_call_operand.hbm [shape: f32[16,32], index: 0, kind: input, shape index: {}]
  %s1 = inlined_call_operand.hbm [shape: f32[32,32], index: 1, kind: input, shape index: {}]
  %s2 = inlined_call_operand.vmem [shape: f32[1,32], index: 2, kind: input, shape index: {}]
  %s3 = inlined_call_operand.hbm [shape: f32[16,32], index: 3, kind: output, shape index: {}]
  %s4 = sld [smem:[#allocation0]]
  $region38: #{tpu_custom_call.1} parent=0
    _
  %s6 = ssub.s32 1, %s4
  %s7 = scalar_select 0, %s6, %s4
  $region1: #{tpu_custom_call.1} parent=0
    #allocation3 [shape = 'u8[8192]{0}', space=vmem, size = 0x2000, scoped, tag = 'input window, operand 0, single buffered']
    #allocation4 [shape = 's32[1]{0}', space=sflag, size = 0x4, scoped, tag = 'scoped memory for tpu_custom_call.1']
    #allocation5 [shape = 's32[1]{0}', space=sflag, size = 0x4, scoped, tag = 'scoped memory for tpu_custom_call.1']
    #allocation6 [shape = 'u8[16384]{0}', space=vmem, size = 0x4000, scoped, tag = 'input window, operand 1, single buffered']
    #allocation7 [shape = 's32[1]{0}', space=sflag, size = 0x4, scoped, tag = 'scoped memory for tpu_custom_call.1']
    #allocation8 [shape = 'u8[8192]{0}', space=vmem, size = 0x2000, scoped, tag = 'output window, operand 0, single buffered']
    %8 = vsyncpa [#allocation4], 0
    %9 = vsyncpa [#allocation7], 0
    %10 = vsyncpa [#allocation5], 0
    // Predicated region
    $region2: #{tpu_custom_call.1} parent=1 // pred_check
      _
    $region3: #{tpu_custom_call.1} parent=1 // pred_check_branch
      %12 = sbr.rel (0) target = $region5
    $region4: #{tpu_custom_call.1} parent=1 // pred_region
      %s14 = ssub.s32 256, 256
      %15 = vsyncadd [#allocation4], %s14
      %s16 = sshll.u32 [#allocation3], 4
      %s17 = int_to_ptr.vmem [resolvable:$true] %s16
      %22 = dma.hbm_to_vmem [thread:$0]  %s0, 256, %s17, [#allocation4], 128, 128, 8
    $region5: #{tpu_custom_call.1} parent=1 // pred_fallthru
      _
    // Predicated region
    $region6: #{tpu_custom_call.1} parent=1 // pred_check
      _
    $region7: #{tpu_custom_call.1} parent=1 // pred_check_branch
      %24 = sbr.rel (0) target = $region9
    $region8: #{tpu_custom_call.1} parent=1 // pred_region
      %s26 = ssub.s32 512, 512
      %27 = vsyncadd [#allocation7], %s26
      %s28 = sshll.u32 [#allocation6], 4
      %s29 = int_to_ptr.vmem [resolvable:$true] %s28
      %34 = dma.hbm_to_vmem [thread:$0]  %s1, 512, %s29, [#allocation7], 128, 128, 8
    $region9: #{tpu_custom_call.1} parent=1 // pred_fallthru
      _
    // Predicated region
    $region10: #{tpu_custom_call.1} parent=1 // pred_check
      _
    $region11: #{tpu_custom_call.1} parent=1 // pred_check_branch
      %36 = sbr.rel (0) target = $region13
    $region12: #{tpu_custom_call.1} parent=1 // pred_region
      _
    $region13: #{tpu_custom_call.1} parent=1 // pred_fallthru
      _
    // Predicated region
    $region14: #{tpu_custom_call.1} parent=1 // pred_check
      _
    $region15: #{tpu_custom_call.1} parent=1 // pred_check_branch
      %38 = sbr.rel (0) target = $region17
    $region16: #{tpu_custom_call.1} parent=1 // pred_region
      %39 = dma.done [#allocation4], 256
    $region17: #{tpu_custom_call.1} parent=1 // pred_fallthru
      _
    // Predicated region
    $region18: #{tpu_custom_call.1} parent=1 // pred_check
      _
    $region19: #{tpu_custom_call.1} parent=1 // pred_check_branch
      %41 = sbr.rel (0) target = $region21
    $region20: #{tpu_custom_call.1} parent=1 // pred_region
      %42 = dma.done [#allocation7], 512
    $region21: #{tpu_custom_call.1} parent=1 // pred_fallthru
      _
    %p43 = scmp.eq.s32.totalorder 0, 0
    // Predicated region
    $region22: #{tpu_custom_call.1} parent=1 // pred_check
      %p44 = pneg %p43
    $region23: #{tpu_custom_call.1} parent=1 // pred_check_branch
      %46 = sbr.rel (%p44) target = $region25
    $region24: #{tpu_custom_call.1} parent=1 // pred_region
      %vm47 = vcmask 261120
      %48 = vst.msk [vmem:[#allocation2] sm:$0xff] %vm47, 0.0
      %49 = vst.msk [vmem:[#allocation2 + $0x8] sm:$0xff] %vm47, 0.0
    $region25: #{tpu_custom_call.1} parent=1 // pred_fallthru
      _
    %v50 = vld [vmem:[#allocation2] sm:$0xff]
    %v51 = vld [vmem:[#allocation2 + $0x8] sm:$0xff]
    %v52 = vld [vmem:[#allocation3] sm:$0xff]
    %v53 = vld [vmem:[#allocation3 + $0x8] sm:$0xff]
    %v54 = vld [vmem:[#allocation6] sm:$0xff]
    %v55 = vld [vmem:[#allocation6 + $0x8] sm:$0xff]
    %v56 = vld [vmem:[#allocation6 + $0x10] sm:$0xff]
    %v57 = vld [vmem:[#allocation6 + $0x18] sm:$0xff]
    %vm58 = vcmask 261120
    %v60 = vsel %vm58, %v52, 0
    %v63 = vsel %vm58, %v53, 0
    %65 = vmatprep.subr.mxu0 0.0
    %66 = vmatpush1.msra.mxu0 %v54
    %67 = vmatprep.subr.mxu0 0.0
    %68 = vmatpush1.msra.mxu0 %v55
    %69 = vmatprep.subr.mxu0 0.0
    %70 = vmatpush1.msra.mxu0 %v56
    %71 = vmatprep.subr.mxu0 0.0
    %72 = vmatpush1.msra.mxu0 %v57
    %73 = vmatprep.subr.mxu0 0.0
    %74 = vmatpush1.msra.mxu0 0.0
    %75 = vmatprep.subr.mxu0 0.0
    %76 = vmatpush1.msra.mxu0 0.0
    %77 = vmatprep.subr.mxu0 0.0
    %78 = vmatpush1.msra.mxu0 0.0
    %79 = vmatprep.subr.mxu0 0.0
    %80 = vmatpush1.msra.mxu0 0.0
    %81 = vmatprep.subr.mxu0 0.0
    %82 = vmatpush1.msra.mxu0 0.0
    %83 = vmatprep.subr.mxu0 0.0
    %84 = vmatpush1.msra.mxu0 0.0
    %85 = vmatprep.subr.mxu0 0.0
    %86 = vmatpush1.msra.mxu0 0.0
    %87 = vmatprep.subr.mxu0 0.0
    %88 = vmatpush1.msra.mxu0 0.0
    %89 = vmatprep.subr.mxu0 0.0
    %90 = vmatpush1.msra.mxu0 0.0
    %91 = vmatprep.subr.mxu0 0.0
    %92 = vmatpush1.msra.mxu0 0.0
    %93 = vmatprep.subr.mxu0 0.0
    %94 = vmatpush1.msra.mxu0 0.0
    %95 = vmatprep.subr.mxu0 0.0
    %96 = vmatpush1.msra.mxu0 0.0
    %97 = vmatprep.subr.mxu0 0.0
    %98 = vmatpush1.msra.mxu0 0.0
    %99 = vmatprep.subr.mxu0 0.0
    %100 = vmatpush1.msra.mxu0 0.0
    %101 = vmatprep.subr.mxu0 0.0
    %102 = vmatpush1.msra.mxu0 0.0
    %103 = vmatprep.subr.mxu0 0.0
    %104 = vmatpush1.msra.mxu0 0.0
    %105 = vmatprep.subr.mxu0 0.0
    %106 = vmatpush1.msra.mxu0 0.0
    %107 = vmatprep.subr.mxu0 0.0
    %108 = vmatpush1.msra.mxu0 0.0
    %109 = vmatprep.subr.mxu0 0.0
    %110 = vmatpush1.msra.mxu0 0.0
    %111 = vmatprep.subr.mxu0 0.0
    %112 = vmatpush1.msra.mxu0 0.0
    %113 = vmatprep.subr.mxu0 0.0
    %114 = vmatpush1.msra.mxu0 0.0
    %115 = vmatprep.subr.mxu0 0.0
    %116 = vmatpush1.msra.mxu0 0.0
    %117 = vmatprep.subr.mxu0 0.0
    %118 = vmatpush1.msra.mxu0 0.0
    %119 = vmatprep.subr.mxu0 0.0
    %120 = vmatpush1.msra.mxu0 0.0
    %121 = vmatprep.subr.mxu0 0.0
    %122 = vmatpush1.msra.mxu0 0.0
    %123 = vmatprep.subr.mxu0 0.0
    %124 = vmatpush1.msra.mxu0 0.0
    %125 = vmatprep.subr.mxu0 0.0
    %126 = vmatpush1.msra.mxu0 0.0
    %127 = vmatprep.subr.mxu0 0.0
    %128 = vmatpush1.msra.mxu0 0.0
    %129 = vmatprep.mubr.f32.mxu0 0.0
    %130 = vmatmul.mubr.f32.gmra.mrb[0].mxu0 %v60
    %v131 = vpop.f32.mrb[0].mxu0
    %v132 = vadd.f32 0.0, %v131
    %v133 = vpop.f32.mrb[0].mxu0
    %134 = vmatprep.mubr.f32.mxu0 0.0
    %135 = vmatmul.mubr.f32.gmra.mrb[0].mxu0 %v63
    %v136 = vpop.f32.mrb[0].mxu0
    %v137 = vadd.f32 0.0, %v136
    %v138 = vpop.f32.mrb[0].mxu0
    %139 = vdwg.mxu0
    %v140 = vadd.f32 %v50, %v132
    %v141 = vadd.f32 %v51, %v137
    %142 = vst.msk [vmem:[#allocation2] sm:$0xff] %vm58, %v140
    %143 = vst.msk [vmem:[#allocation2 + $0x8] sm:$0xff] %vm58, %v141
    // Predicated region
    $region26: #{tpu_custom_call.1} parent=1 // pred_check
      %p144 = pneg %p43
    $region27: #{tpu_custom_call.1} parent=1 // pred_check_branch
      %146 = sbr.rel (%p144) target = $region29
    $region28: #{tpu_custom_call.1} parent=1 // pred_region
      %v147 = vld [vmem:[#allocation2] sm:$0xff]
      %v148 = vld [vmem:[#allocation2 + $0x8] sm:$0xff]
      %v149 = vld [vmem:[%s2] sm:$0x1]
      %v151 = vlaneseq
      %v152 = vshrl.u32 %v151, 7
      %v153 = vsub.s32 0, %v152
      %v154 = vrot.slane %v149, %v153
      %v156 = vadd.f32 %v147, %v154
      %v157 = vadd.f32 %v148, %v154
      %158 = vst.msk [vmem:[#allocation8] sm:$0xff] %vm58, %v156
      %159 = vst.msk [vmem:[#allocation8 + $0x8] sm:$0xff] %vm58, %v157
    $region29: #{tpu_custom_call.1} parent=1 // pred_fallthru
      _
    // Predicated region
    $region30: #{tpu_custom_call.1} parent=1 // pred_check
      _
    $region31: #{tpu_custom_call.1} parent=1 // pred_check_branch
      %161 = sbr.rel (0) target = $region33
    $region32: #{tpu_custom_call.1} parent=1 // pred_region
      %s163 = ssub.s32 256, 256
      %164 = vsyncadd [#allocation5], %s163
      %s165 = sshll.u32 [#allocation8], 4
      %s166 = int_to_ptr.vmem [resolvable:$true] %s165
      %171 = dma.vmem_to_hbm [thread:$0]  %s166, 256, %s3, [#allocation5], 128, 128, 8
    $region33: #{tpu_custom_call.1} parent=1 // pred_fallthru
      _
    // Predicated region
    $region34: #{tpu_custom_call.1} parent=1 // pred_check
      _
    $region35: #{tpu_custom_call.1} parent=1 // pred_check_branch
      %173 = sbr.rel (0) target = $region37
    $region36: #{tpu_custom_call.1} parent=1 // pred_region
      %174 = dma.done [#allocation5], 256
    $region37: #{tpu_custom_call.1} parent=1 // pred_fallthru
      _
    %175 = vsyncpa [#allocation4], 1
    %176 = vsyncpa [#allocation7], 1
    %177 = vsyncpa [#allocation5], 1

</llo_original>
